<compile_context>
chip_gen: v5e
topology: v5e:2x2
jax: 0.10.0
libtpu: 0.0.40
codegen_flags: <defaults>
</compile_context>

<pallas_src>
import functools

import jax
import jax.numpy as jnp
from jax.experimental import pallas as pl
from jax.experimental.pallas import tpu as pltpu


LANE = 128          # lane-dim padding granularity (output stays vst-dense)
SUBLANE_BF16 = 16   # bf16 sublane packing


def _round_up(x, m):
    return ((x + m - 1) // m) * m


def _choose_batch_tiling(B):
    """Return (padded_batch, TM, n_grid_steps)."""
    b16 = _round_up(max(B, 1), SUBLANE_BF16)
    # Enough steps to keep tiles <= ~1024 rows; >=2 steps when there is enough
    # work so the two TensorCores on v7x both get a share of the batch.
    n_steps = max(1, pl.cdiv(b16, 1024))
    if b16 >= 2 * SUBLANE_BF16:
        n_steps = max(n_steps, 2)
    tm = _round_up(pl.cdiv(b16, n_steps), SUBLANE_BF16)
    return n_steps * tm, tm, n_steps


def mlp_kernel(x_ref, w1_ref, b1_ref, w2_ref, b2_ref, w3_ref, b3_ref,
               out_ref):
    """(TM, Cin) @ W1 -> ReLU -> @ W2' -> ReLU -> @ W3' (BN / 1/T pre-folded).

    Matmul operands are bf16; accumulation and bias/ReLU happen in f32.
    """
    x = x_ref[...]                                            # (TM, Cin) bf16
    h1 = jnp.dot(x, w1_ref[...], preferred_element_type=jnp.float32)
    h1 = jnp.maximum(h1 + b1_ref[...], 0.0)

    h2 = jnp.dot(h1.astype(w2_ref.dtype), w2_ref[...],
                 preferred_element_type=jnp.float32)
    h2 = jnp.maximum(h2 + b2_ref[...], 0.0)

    out_ref[...] = jnp.dot(h2.astype(w3_ref.dtype), w3_ref[...],
                           preferred_element_type=jnp.float32) + b3_ref[...]


def prepare_params(params, temperature=1.0, compute_dtype=jnp.bfloat16):
    """One-time prep: fold BN (eval) + 1/T into W2/W3, pad lanes, cast.

    Call once; pass the result to the jitted forward on every inference call.
    """
    (w1t, b1, s1, t1, w2t, b2, s2, t2, w3t, b3) = params
    hidden1 = w1t.shape[1]
    hidden2 = w2t.shape[1]
    classes = w3t.shape[1]
    inv_t = 1.0 / float(temperature)

    # bn1(relu(xW1+b1)) @ W2 + b2  ==  relu(xW1+b1) @ (diag(s1) W2) + (t1 W2 + b2)
    w2f = s1.reshape(-1, 1) * w2t                   # (hidden1, hidden2)
    b2f = t1 @ w2t + b2                             # (1, hidden2)
    # (bn2(relu(.)) @ W3 + b3) / T
    w3f = (s2.reshape(-1, 1) * w3t) * inv_t         # (hidden2, classes)
    b3f = (t2 @ w3t + b3) * inv_t                   # (1, classes)

    h1_p = _round_up(hidden1, LANE)
    h2_p = _round_up(hidden2, LANE)
    cls_p = _round_up(classes, LANE)

    def pad2(a, rows, cols):
        return jnp.pad(a, ((0, rows - a.shape[0]), (0, cols - a.shape[1])))

    w1_p = pad2(w1t, w1t.shape[0], h1_p).astype(compute_dtype)   # C_in unpadded
    b1_p = pad2(b1, 1, h1_p).astype(jnp.float32)
    w2_p = pad2(w2f, h1_p, h2_p).astype(compute_dtype)
    b2_p = pad2(b2f, 1, h2_p).astype(jnp.float32)
    w3_p = pad2(w3f, h2_p, cls_p).astype(compute_dtype)
    b3_p = pad2(b3f, 1, cls_p).astype(jnp.float32)

    prepped = (w1_p, b1_p, w2_p, b2_p, w3_p, b3_p)
    return prepped, classes


def net_vanilla_nn_small_forward(x_nchw, prepped, *, classes):
    """x_nchw: (B, C_in, 1, 1). `prepped` from prepare_params().

    Returns (B, classes) float32.
    """
    B, C_in, H, W = x_nchw.shape
    assert H == 1 and W == 1, "forward .view() requires 1x1 spatial"
    (w1_p, b1_p, w2_p, b2_p, w3_p, b3_p) = prepped
    h1_p = w1_p.shape[1]
    h2_p = w2_p.shape[1]
    cls_p = w3_p.shape[1]
    compute_dtype = w1_p.dtype

    b_p, TM, n_steps = _choose_batch_tiling(B)

    x = x_nchw.reshape(B, C_in).astype(compute_dtype)
    if b_p != B:
        x = jnp.pad(x, ((0, b_p - B), (0, 0)))

    itm = jnp.dtype(compute_dtype).itemsize
    cost = pl.CostEstimate(
        flops=2 * b_p * (C_in * h1_p + h1_p * h2_p + h2_p * cls_p),
        transcendentals=0,
        bytes_accessed=(
            b_p * C_in * itm                      # x
            + (C_in * h1_p + h1_p * h2_p + h2_p * cls_p) * itm   # weights
            + (h1_p + h2_p + cls_p) * 4           # biases (f32)
            + b_p * cls_p * 4                     # output (f32)
        ),
    )

    out_p = pl.pallas_call(
        mlp_kernel,
        out_shape=jax.ShapeDtypeStruct((b_p, cls_p), jnp.float32),
        grid=(b_p // TM,),
        in_specs=[
            pl.BlockSpec((TM, C_in), lambda i: (i, 0)),       # x tile (moves)
            pl.BlockSpec((C_in, h1_p), lambda i: (0, 0)),     # W1 (resident)
            pl.BlockSpec((1, h1_p), lambda i: (0, 0)),        # b1
            pl.BlockSpec((h1_p, h2_p), lambda i: (0, 0)),     # W2' (resident)
            pl.BlockSpec((1, h2_p), lambda i: (0, 0)),        # b2'
            pl.BlockSpec((h2_p, cls_p), lambda i: (0, 0)),    # W3' (resident)
            pl.BlockSpec((1, cls_p), lambda i: (0, 0)),       # b3'
        ],
        out_specs=pl.BlockSpec((TM, cls_p), lambda i: (i, 0)),
        compiler_params=pltpu.CompilerParams(
            dimension_semantics=("parallel",)),
        cost_estimate=cost,
    )(x, w1_p, b1_p, w2_p, b2_p, w3_p, b3_p)

    return out_p[:B, :classes]


def init_params(key, input_channels, hidden_ratio=1.0, classes=10,
                bn_eps=1e-5):
    """Deterministic synthetic parameters matching the PyTorch module shapes."""
    hidden = int(50 * hidden_ratio)
    keys = jax.random.split(key, 6)

    def conv1x1(kw, kb, fan_in, fan_out):
        bound = 1.0 / jnp.sqrt(fan_in)
        # stored transposed: (in, out) so the kernel does x @ W
        w_t = jax.random.uniform(kw, (fan_in, fan_out), jnp.float32,
                                 -bound, bound)
        b = jax.random.uniform(kb, (1, fan_out), jnp.float32, -bound, bound)
        return w_t, b

    w1t, b1 = conv1x1(keys[0], keys[1], input_channels, hidden)
    w2t, b2 = conv1x1(keys[2], keys[3], hidden, hidden)
    w3t, b3 = conv1x1(keys[4], keys[5], hidden, classes)

    # BatchNorm2d eval-mode with PyTorch default init:
    # gamma=1, beta=0, running_mean=0, running_var=1
    # TODO(synk): training-mode batch statistics are not implemented (eval fold only).
    def bn_fold(num_features):
        gamma = jnp.ones((num_features,), jnp.float32)
        beta = jnp.zeros((num_features,), jnp.float32)
        running_mean = jnp.zeros((num_features,), jnp.float32)
        running_var = jnp.ones((num_features,), jnp.float32)
        scale = gamma / jnp.sqrt(running_var + bn_eps)
        shift = beta - running_mean * scale
        return scale.reshape(1, -1), shift.reshape(1, -1)

    s1, t1 = bn_fold(hidden)
    s2, t2 = bn_fold(hidden)

    return (w1t, b1, s1, t1, w2t, b2, s2, t2, w3t, b3)


def reference_forward(x_nchw, params, temperature=1.0):
    """Pure-JAX f32 reference matching the PyTorch eval-mode forward."""
    x = x_nchw.reshape(x_nchw.shape[0], -1).astype(jnp.float32)
    (w1t, b1, s1, t1, w2t, b2, s2, t2, w3t, b3) = params
    h1 = jnp.maximum(x @ w1t + b1, 0.0) * s1 + t1
    h2 = jnp.maximum(h1 @ w2t + b2, 0.0) * s2 + t2
    return (h2 @ w3t + b3) / temperature


if __name__ == "__main__":
    key = jax.random.PRNGKey(0)
    k_x, k_p = jax.random.split(key)

    B = 2
    input_channels = 4
    classes = 10
    hidden_ratio = 1.0

    # Input consistent with forward(): NCHW with 1x1 spatial.
    x = jax.random.normal(k_x, (B, input_channels, 1, 1), jnp.float32)

    params = init_params(k_p, input_channels, hidden_ratio, classes)

    # One-time parameter prep (fold BN + 1/T, pad, cast) outside the call path.
    prepped, n_classes = prepare_params(params, temperature=1.0)
    prepped = jax.block_until_ready(prepped)

    fwd = jax.jit(functools.partial(net_vanilla_nn_small_forward,
                                    classes=n_classes))
    out = fwd(x, prepped)
    out = jax.block_until_ready(out)

    ref = reference_forward(x, params, temperature=1.0)

    assert out.shape == (B, classes)
    assert jnp.all(jnp.isfinite(out))
    # bf16 MXU operands with f32 accumulation -> loosened tolerance vs f32 ref.
    assert jnp.allclose(out, ref, rtol=5e-2, atol=5e-2)
    print("KERNEL_OK")
</pallas_src>

<mosaic_0001>
module attributes {stable_mosaic.version = 11 : i64} {
  func.func @mlp_kernel(%arg0: i32, %arg1: memref<16x4xbf16, #tpu.memory_space<vmem>>, %arg2: memref<4x128xbf16, #tpu.memory_space<vmem>>, %arg3: memref<1x128xf32, #tpu.memory_space<vmem>>, %arg4: memref<128x128xbf16, #tpu.memory_space<vmem>>, %arg5: memref<1x128xf32, #tpu.memory_space<vmem>>, %arg6: memref<128x128xbf16, #tpu.memory_space<vmem>>, %arg7: memref<1x128xf32, #tpu.memory_space<vmem>>, %arg8: memref<16x128xf32, #tpu.memory_space<vmem>>) attributes {dimension_semantics = [#tpu.dimension_semantics<parallel>], iteration_bounds = array<i64: 1>, scalar_prefetch = 0 : i64, scratch_operands = 0 : i64, tpu.core_type = #tpu.core_type<tc>, window_params = [{transform_indices = @transform_0, window_bounds = array<i64: 16, 4>}, {pipeline_mode = #tpu.pipeline_mode<synchronous>, transform_indices = @transform_1, window_bounds = array<i64: 4, 128>}, {pipeline_mode = #tpu.pipeline_mode<synchronous>, transform_indices = @transform_2, window_bounds = array<i64: 1, 128>}, {pipeline_mode = #tpu.pipeline_mode<synchronous>, transform_indices = @transform_3, window_bounds = array<i64: 128, 128>}, {pipeline_mode = #tpu.pipeline_mode<synchronous>, transform_indices = @transform_4, window_bounds = array<i64: 1, 128>}, {pipeline_mode = #tpu.pipeline_mode<synchronous>, transform_indices = @transform_5, window_bounds = array<i64: 128, 128>}, {pipeline_mode = #tpu.pipeline_mode<synchronous>, transform_indices = @transform_6, window_bounds = array<i64: 1, 128>}, {transform_indices = @transform_7, window_bounds = array<i64: 16, 128>}]} {
    %c0 = arith.constant 0 : index
    %c0_0 = arith.constant 0 : index
    %0 = vector.load %arg1[%c0, %c0_0] : memref<16x4xbf16, #tpu.memory_space<vmem>>, vector<16x4xbf16>
    %c0_1 = arith.constant 0 : index
    %c0_2 = arith.constant 0 : index
    %1 = vector.load %arg2[%c0_1, %c0_2] : memref<4x128xbf16, #tpu.memory_space<vmem>>, vector<4x128xbf16>
    %cst = arith.constant dense<0.000000e+00> : vector<16x128xf32>
    %2 = tpu.matmul %0, %1, %cst {dimension_numbers = #tpu.dot_dimension_numbers<[1], [0], [0], [1], [0, 0, 1, 1], [], []>} : vector<16x4xbf16>, vector<4x128xbf16>, vector<16x128xf32> -> vector<16x128xf32>
    %c0_3 = arith.constant 0 : index
    %c0_4 = arith.constant 0 : index
    %3 = vector.load %arg3[%c0_3, %c0_4] : memref<1x128xf32, #tpu.memory_space<vmem>>, vector<1x128xf32>
    %4 = vector.broadcast %3 : vector<1x128xf32> to vector<16x128xf32>
    %5 = arith.addf %2, %4 : vector<16x128xf32>
    %cst_5 = arith.constant 0.000000e+00 : f32
    %6 = vector.broadcast %cst_5 : f32 to vector<16x128xf32>
    %7 = arith.maximumf %5, %6 : vector<16x128xf32>
    %8 = arith.truncf %7 : vector<16x128xf32> to vector<16x128xbf16>
    %c0_6 = arith.constant 0 : index
    %c0_7 = arith.constant 0 : index
    %9 = vector.load %arg4[%c0_6, %c0_7] : memref<128x128xbf16, #tpu.memory_space<vmem>>, vector<128x128xbf16>
    %cst_8 = arith.constant dense<0.000000e+00> : vector<16x128xf32>
    %10 = tpu.matmul %8, %9, %cst_8 {dimension_numbers = #tpu.dot_dimension_numbers<[1], [0], [0], [1], [0, 0, 1, 1], [], []>} : vector<16x128xbf16>, vector<128x128xbf16>, vector<16x128xf32> -> vector<16x128xf32>
    %c0_9 = arith.constant 0 : index
    %c0_10 = arith.constant 0 : index
    %11 = vector.load %arg5[%c0_9, %c0_10] : memref<1x128xf32, #tpu.memory_space<vmem>>, vector<1x128xf32>
    %12 = vector.broadcast %11 : vector<1x128xf32> to vector<16x128xf32>
    %13 = arith.addf %10, %12 : vector<16x128xf32>
    %cst_11 = arith.constant 0.000000e+00 : f32
    %14 = vector.broadcast %cst_11 : f32 to vector<16x128xf32>
    %15 = arith.maximumf %13, %14 : vector<16x128xf32>
    %16 = arith.truncf %15 : vector<16x128xf32> to vector<16x128xbf16>
    %c0_12 = arith.constant 0 : index
    %c0_13 = arith.constant 0 : index
    %17 = vector.load %arg6[%c0_12, %c0_13] : memref<128x128xbf16, #tpu.memory_space<vmem>>, vector<128x128xbf16>
    %cst_14 = arith.constant dense<0.000000e+00> : vector<16x128xf32>
    %18 = tpu.matmul %16, %17, %cst_14 {dimension_numbers = #tpu.dot_dimension_numbers<[1], [0], [0], [1], [0, 0, 1, 1], [], []>} : vector<16x128xbf16>, vector<128x128xbf16>, vector<16x128xf32> -> vector<16x128xf32>
    %c0_15 = arith.constant 0 : index
    %c0_16 = arith.constant 0 : index
    %19 = vector.load %arg7[%c0_15, %c0_16] : memref<1x128xf32, #tpu.memory_space<vmem>>, vector<1x128xf32>
    %20 = vector.broadcast %19 : vector<1x128xf32> to vector<16x128xf32>
    %21 = arith.addf %18, %20 : vector<16x128xf32>
    %c0_17 = arith.constant 0 : index
    %c0_18 = arith.constant 0 : index
    %22 = vector.load %arg8[%c0_17, %c0_18] : memref<16x128xf32, #tpu.memory_space<vmem>>, vector<16x128xf32>
    tpu.vector_store %arg8[%c0_17, %c0_18], %21 {strides = array<i32>} : memref<16x128xf32, #tpu.memory_space<vmem>>, vector<16x128xf32>,
    return
  }
  func.func @transform_0(%arg0: i32) -> (i32, i32) {
    %c0_i32 = arith.constant 0 : i32
    %c0_i32_0 = arith.constant 0 : i32
    return %arg0, %c0_i32 : i32, i32
  }
  func.func @transform_1(%arg0: i32) -> (i32, i32) {
    %c0_i32 = arith.constant 0 : i32
    %c0_i32_0 = arith.constant 0 : i32
    %c0_i32_1 = arith.constant 0 : i32
    return %c0_i32, %c0_i32_0 : i32, i32
  }
  func.func @transform_2(%arg0: i32) -> (i32, i32) {
    %c0_i32 = arith.constant 0 : i32
    %c0_i32_0 = arith.constant 0 : i32
    %c0_i32_1 = arith.constant 0 : i32
    return %c0_i32, %c0_i32_0 : i32, i32
  }
  func.func @transform_3(%arg0: i32) -> (i32, i32) {
    %c0_i32 = arith.constant 0 : i32
    %c0_i32_0 = arith.constant 0 : i32
    %c0_i32_1 = arith.constant 0 : i32
    return %c0_i32, %c0_i32_0 : i32, i32
  }
  func.func @transform_4(%arg0: i32) -> (i32, i32) {
    %c0_i32 = arith.constant 0 : i32
    %c0_i32_0 = arith.constant 0 : i32
    %c0_i32_1 = arith.constant 0 : i32
    return %c0_i32, %c0_i32_0 : i32, i32
  }
  func.func @transform_5(%arg0: i32) -> (i32, i32) {
    %c0_i32 = arith.constant 0 : i32
    %c0_i32_0 = arith.constant 0 : i32
    %c0_i32_1 = arith.constant 0 : i32
    return %c0_i32, %c0_i32_0 : i32, i32
  }
  func.func @transform_6(%arg0: i32) -> (i32, i32) {
    %c0_i32 = arith.constant 0 : i32
    %c0_i32_0 = arith.constant 0 : i32
    %c0_i32_1 = arith.constant 0 : i32
    return %c0_i32, %c0_i32_0 : i32, i32
  }
  func.func @transform_7(%arg0: i32) -> (i32, i32) {
    %c0_i32 = arith.constant 0 : i32
    %c0_i32_0 = arith.constant 0 : i32
    return %arg0, %c0_i32 : i32, i32
  }
}

</mosaic_0001>

<llo_original>
// kernel: net_vanilla_nn_small_forward.1
$region0: #{net_vanilla_nn_small_forward.1}
  #allocation0 [shape = 'u32[]', space=smem, size = 0x4, offset = 0x4, fixed_abs, tag = 'smem constant byte address 0x4 - core index']
  #allocation1 [shape = 'u32[72,128]{1,0:T(1,128)}', space=vmem, size = 0x9000, scoped, tag = 'internal scratch']
  %s0 = inlined_call_operand.vmem [shape: bf16[16,4], index: 0, kind: input, shape index: {}]
  %s1 = inlined_call_operand.vmem [shape: bf16[4,128], index: 1, kind: input, shape index: {}]
  %s2 = inlined_call_operand.vmem [shape: f32[1,128], index: 2, kind: input, shape index: {}]
  %s3 = inlined_call_operand.hbm [shape: bf16[128,128], index: 3, kind: input, shape index: {}]
  %s4 = inlined_call_operand.vmem [shape: f32[1,128], index: 4, kind: input, shape index: {}]
  %s5 = inlined_call_operand.hbm [shape: bf16[128,128], index: 5, kind: input, shape index: {}]
  %s6 = inlined_call_operand.vmem [shape: f32[1,128], index: 6, kind: input, shape index: {}]
  %s7 = inlined_call_operand.vmem [shape: f32[16,128], index: 7, kind: output, shape index: {}]
  %s8 = sld [smem:[#allocation0]]
  $region46: #{net_vanilla_nn_small_forward.1} parent=0
    _
  %s10 = ssub.s32 1, %s8
  %s11 = scalar_select 0, %s10, %s8
  $region1: #{net_vanilla_nn_small_forward.1} parent=0
    #allocation2 [shape = 'u8[32768]{0}', space=vmem, size = 0x8000, scoped, tag = 'input window, operand 3, single buffered']
    #allocation3 [shape = 's32[1]{0}', space=sflag, size = 0x4, scoped, tag = 'scoped memory for net_vanilla_nn_small_forward.1']
    #allocation4 [shape = 'u8[32768]{0}', space=vmem, size = 0x8000, scoped, tag = 'input window, operand 5, single buffered']
    #allocation5 [shape = 's32[1]{0}', space=sflag, size = 0x4, scoped, tag = 'scoped memory for net_vanilla_nn_small_forward.1']
    %12 = vsyncpa [#allocation3], 0
    %13 = vsyncpa [#allocation5], 0
    // Predicated region
    $region2: #{net_vanilla_nn_small_forward.1} parent=1 // pred_check
      _
    $region3: #{net_vanilla_nn_small_forward.1} parent=1 // pred_check_branch
      %15 = sbr.rel (0) target = $region5
    $region4: #{net_vanilla_nn_small_forward.1} parent=1 // pred_region
      _
    $region5: #{net_vanilla_nn_small_forward.1} parent=1 // pred_fallthru
      _
    // Predicated region
    $region6: #{net_vanilla_nn_small_forward.1} parent=1 // pred_check
      _
    $region7: #{net_vanilla_nn_small_forward.1} parent=1 // pred_check_branch
      %17 = sbr.rel (0) target = $region9
    $region8: #{net_vanilla_nn_small_forward.1} parent=1 // pred_region
      _
    $region9: #{net_vanilla_nn_small_forward.1} parent=1 // pred_fallthru
      _
    // Predicated region
    $region10: #{net_vanilla_nn_small_forward.1} parent=1 // pred_check
      _
    $region11: #{net_vanilla_nn_small_forward.1} parent=1 // pred_check_branch
      %19 = sbr.rel (0) target = $region13
    $region12: #{net_vanilla_nn_small_forward.1} parent=1 // pred_region
      _
    $region13: #{net_vanilla_nn_small_forward.1} parent=1 // pred_fallthru
      _
    // Predicated region
    $region14: #{net_vanilla_nn_small_forward.1} parent=1 // pred_check
      _
    $region15: #{net_vanilla_nn_small_forward.1} parent=1 // pred_check_branch
      %21 = sbr.rel (0) target = $region17
    $region16: #{net_vanilla_nn_small_forward.1} parent=1 // pred_region
      %23 = vsyncadd [#allocation3], 0
      %s24 = sshll.u32 %s3, 4
      %s25 = int_to_ptr.hbm [resolvable:$true] %s24
      %s26 = sshll.u32 [#allocation2], 4
      %s27 = int_to_ptr.vmem [resolvable:$true] %s26
      %32 = dma.hbm_to_vmem [thread:$0]  %s25, 1024, %s27, [#allocation3], 64, 64, 4
    $region17: #{net_vanilla_nn_small_forward.1} parent=1 // pred_fallthru
      _
    // Predicated region
    $region18: #{net_vanilla_nn_small_forward.1} parent=1 // pred_check
      _
    $region19: #{net_vanilla_nn_small_forward.1} parent=1 // pred_check_branch
      %34 = sbr.rel (0) target = $region21
    $region20: #{net_vanilla_nn_small_forward.1} parent=1 // pred_region
      _
    $region21: #{net_vanilla_nn_small_forward.1} parent=1 // pred_fallthru
      _
    // Predicated region
    $region22: #{net_vanilla_nn_small_forward.1} parent=1 // pred_check
      _
    $region23: #{net_vanilla_nn_small_forward.1} parent=1 // pred_check_branch
      %36 = sbr.rel (0) target = $region25
    $region24: #{net_vanilla_nn_small_forward.1} parent=1 // pred_region
      %38 = vsyncadd [#allocation5], 0
      %s39 = sshll.u32 %s5, 4
      %s40 = int_to_ptr.hbm [resolvable:$true] %s39
      %s41 = sshll.u32 [#allocation4], 4
      %s42 = int_to_ptr.vmem [resolvable:$true] %s41
      %47 = dma.hbm_to_vmem [thread:$0]  %s40, 1024, %s42, [#allocation5], 64, 64, 4
    $region25: #{net_vanilla_nn_small_forward.1} parent=1 // pred_fallthru
      _
    // Predicated region
    $region26: #{net_vanilla_nn_small_forward.1} parent=1 // pred_check
      _
    $region27: #{net_vanilla_nn_small_forward.1} parent=1 // pred_check_branch
      %49 = sbr.rel (0) target = $region29
    $region28: #{net_vanilla_nn_small_forward.1} parent=1 // pred_region
      _
    $region29: #{net_vanilla_nn_small_forward.1} parent=1 // pred_fallthru
      _
    // Predicated region
    $region30: #{net_vanilla_nn_small_forward.1} parent=1 // pred_check
      _
    $region31: #{net_vanilla_nn_small_forward.1} parent=1 // pred_check_branch
      %51 = sbr.rel (0) target = $region33
    $region32: #{net_vanilla_nn_small_forward.1} parent=1 // pred_region
      %53 = dma.done [#allocation3], 1024
    $region33: #{net_vanilla_nn_small_forward.1} parent=1 // pred_fallthru
      _
    // Predicated region
    $region34: #{net_vanilla_nn_small_forward.1} parent=1 // pred_check
      _
    $region35: #{net_vanilla_nn_small_forward.1} parent=1 // pred_check_branch
      %55 = sbr.rel (0) target = $region37
    $region36: #{net_vanilla_nn_small_forward.1} parent=1 // pred_region
      %57 = dma.done [#allocation5], 1024
    $region37: #{net_vanilla_nn_small_forward.1} parent=1 // pred_fallthru
      _
    %v59 = vld [vmem:[%s0] sm:$0xf]
    %v60 = vld [vmem:[%s0 + $0x4] sm:$0xf]
    %v61 = vld [vmem:[%s1] sm:$0x3]
    %v62 = vld [vmem:[%s2] sm:$0x1]
    %v64 = vperm.slane %v62, 0
    %v68 = vunpack.c.l.b16 %v59
    %v69 = vunpack.c.l.b16 %v60
    %v70 = vpack.c.b16 %v69, %v68
    %vm71 = vcmask 31744
    %v73 = vsel %vm71, %v70, 0
    %vm75 = vcmask 1041408
    %v77 = vsel %vm75, %v61, 0
    %79 = vmatpush.bf16.msra.mxu0 0
    %80 = vmatpush.bf16.msra.mxu0 0
    %81 = vmatpush.bf16.msra.mxu0 0
    %82 = vmatpush.bf16.msra.mxu0 0
    %83 = vmatpush.bf16.msra.mxu0 0
    %84 = vmatpush.bf16.msra.mxu0 0
    %85 = vmatpush.bf16.msra.mxu0 0
    %86 = vmatpush.bf16.msra.mxu0 %v77
    %87 = vmatmul.bf16.gmra.mxu0 %v73
    %v88 = vpop.f32.mrf.mxu0
    %v89 = vadd.f32 %v64, %v88
    %v90 = vpop.f32.mrf.mxu0
    %v91 = vadd.f32 %v64, %v90
    %92 = vdwg.mxu0
    %v93 = vmax.f32 %v89, 0.0
    %v94 = vmax.f32 %v91, 0.0
    %v95 = vpack.c.bf16 %v94, %v93
    %v96 = vld [vmem:[#allocation2] sm:$0xf]
    %v97 = vld [vmem:[#allocation2 + $0x4] sm:$0xf]
    %v98 = vld [vmem:[#allocation2 + $0x8] sm:$0xf]
    %v99 = vld [vmem:[#allocation2 + $0xc] sm:$0xf]
    %v100 = vld [vmem:[#allocation2 + $0x10] sm:$0xf]
    %v101 = vld [vmem:[#allocation2 + $0x14] sm:$0xf]
    %v102 = vld [vmem:[#allocation2 + $0x18] sm:$0xf]
    %v103 = vld [vmem:[#allocation2 + $0x1c] sm:$0xf]
    %v104 = vld [vmem:[#allocation2 + $0x20] sm:$0xf]
    %v105 = vld [vmem:[#allocation2 + $0x24] sm:$0xf]
    %v106 = vld [vmem:[#allocation2 + $0x28] sm:$0xf]
    %v107 = vld [vmem:[#allocation2 + $0x2c] sm:$0xf]
    %v108 = vld [vmem:[#allocation2 + $0x30] sm:$0xf]
    %v109 = vld [vmem:[#allocation2 + $0x34] sm:$0xf]
    %v110 = vld [vmem:[#allocation2 + $0x38] sm:$0xf]
    %v111 = vld [vmem:[#allocation2 + $0x3c] sm:$0xf]
    %v112 = vld [vmem:[%s4] sm:$0x1]
    %v114 = vperm.slane %v112, 0
    %v132 = vunpack.c.l.b16 %v96
    %v133 = vunpack.c.l.b16 %v97
    %v134 = vunpack.c.l.b16 %v98
    %v135 = vunpack.c.l.b16 %v99
    %v136 = vunpack.c.l.b16 %v100
    %v137 = vunpack.c.l.b16 %v101
    %v138 = vunpack.c.l.b16 %v102
    %v139 = vunpack.c.l.b16 %v103
    %v140 = vunpack.c.l.b16 %v104
    %v141 = vunpack.c.l.b16 %v105
    %v142 = vunpack.c.l.b16 %v106
    %v143 = vunpack.c.l.b16 %v107
    %v144 = vunpack.c.l.b16 %v108
    %v145 = vunpack.c.l.b16 %v109
    %v146 = vunpack.c.l.b16 %v110
    %v147 = vunpack.c.l.b16 %v111
    %v148 = vpack.c.b16 %v133, %v132
    %v149 = vpack.c.b16 %v135, %v134
    %v150 = vpack.c.b16 %v137, %v136
    %v151 = vpack.c.b16 %v139, %v138
    %v152 = vpack.c.b16 %v141, %v140
    %v153 = vpack.c.b16 %v143, %v142
    %v154 = vpack.c.b16 %v145, %v144
    %v155 = vpack.c.b16 %v147, %v146
    %164 = vmatpush.bf16.msra.mxu0 %v155
    %165 = vmatpush.bf16.msra.mxu0 %v154
    %166 = vmatpush.bf16.msra.mxu0 %v153
    %167 = vmatpush.bf16.msra.mxu0 %v152
    %168 = vmatpush.bf16.msra.mxu0 %v151
    %169 = vmatpush.bf16.msra.mxu0 %v150
    %170 = vmatpush.bf16.msra.mxu0 %v149
    %171 = vmatpush.bf16.msra.mxu0 %v148
    %172 = vmatmul.bf16.gmra.mxu0 %v95
    %v173 = vpop.f32.mrf.mxu0
    %v174 = vadd.f32 %v114, %v173
    %v175 = vpop.f32.mrf.mxu0
    %v176 = vadd.f32 %v114, %v175
    %177 = vdwg.mxu0
    %v178 = vmax.f32 %v174, 0.0
    %v179 = vmax.f32 %v176, 0.0
    %v180 = vpack.c.bf16 %v179, %v178
    %v181 = vld [vmem:[#allocation4] sm:$0xf]
    %v182 = vld [vmem:[#allocation4 + $0x4] sm:$0xf]
    %v183 = vld [vmem:[#allocation4 + $0x8] sm:$0xf]
    %v184 = vld [vmem:[#allocation4 + $0xc] sm:$0xf]
    %v185 = vld [vmem:[#allocation4 + $0x10] sm:$0xf]
    %v186 = vld [vmem:[#allocation4 + $0x14] sm:$0xf]
    %v187 = vld [vmem:[#allocation4 + $0x18] sm:$0xf]
    %v188 = vld [vmem:[#allocation4 + $0x1c] sm:$0xf]
    %v189 = vld [vmem:[#allocation4 + $0x20] sm:$0xf]
    %v190 = vld [vmem:[#allocation4 + $0x24] sm:$0xf]
    %v191 = vld [vmem:[#allocation4 + $0x28] sm:$0xf]
    %v192 = vld [vmem:[#allocation4 + $0x2c] sm:$0xf]
    %v193 = vld [vmem:[#allocation4 + $0x30] sm:$0xf]
    %v194 = vld [vmem:[#allocation4 + $0x34] sm:$0xf]
    %v195 = vld [vmem:[#allocation4 + $0x38] sm:$0xf]
    %v196 = vld [vmem:[#allocation4 + $0x3c] sm:$0xf]
    %v197 = vld [vmem:[%s6] sm:$0x1]
    %v199 = vperm.slane %v197, 0
    %v217 = vunpack.c.l.b16 %v181
    %v218 = vunpack.c.l.b16 %v182
    %v219 = vunpack.c.l.b16 %v183
    %v220 = vunpack.c.l.b16 %v184
    %v221 = vunpack.c.l.b16 %v185
    %v222 = vunpack.c.l.b16 %v186
    %v223 = vunpack.c.l.b16 %v187
    %v224 = vunpack.c.l.b16 %v188
    %v225 = vunpack.c.l.b16 %v189
    %v226 = vunpack.c.l.b16 %v190
    %v227 = vunpack.c.l.b16 %v191
    %v228 = vunpack.c.l.b16 %v192
    %v229 = vunpack.c.l.b16 %v193
    %v230 = vunpack.c.l.b16 %v194
    %v231 = vunpack.c.l.b16 %v195
    %v232 = vunpack.c.l.b16 %v196
    %v233 = vpack.c.b16 %v218, %v217
    %v234 = vpack.c.b16 %v220, %v219
    %v235 = vpack.c.b16 %v222, %v221
    %v236 = vpack.c.b16 %v224, %v223
    %v237 = vpack.c.b16 %v226, %v225
    %v238 = vpack.c.b16 %v228, %v227
    %v239 = vpack.c.b16 %v230, %v229
    %v240 = vpack.c.b16 %v232, %v231
    %249 = vmatpush.bf16.msra.mxu0 %v240
    %250 = vmatpush.bf16.msra.mxu0 %v239
    %251 = vmatpush.bf16.msra.mxu0 %v238
    %252 = vmatpush.bf16.msra.mxu0 %v237
    %253 = vmatpush.bf16.msra.mxu0 %v236
    %254 = vmatpush.bf16.msra.mxu0 %v235
    %255 = vmatpush.bf16.msra.mxu0 %v234
    %256 = vmatpush.bf16.msra.mxu0 %v233
    %257 = vmatmul.bf16.gmra.mxu0 %v180
    %v258 = vpop.f32.mrf.mxu0
    %v259 = vadd.f32 %v199, %v258
    %v260 = vpop.f32.mrf.mxu0
    %v261 = vadd.f32 %v199, %v260
    %262 = vdwg.mxu0
    %263 = vst [vmem:[%s7] sm:$0xff] %v259
    %264 = vst [vmem:[%s7 + $0x8] sm:$0xff] %v261
    // Predicated region
    $region38: #{net_vanilla_nn_small_forward.1} parent=1 // pred_check
      _
    $region39: #{net_vanilla_nn_small_forward.1} parent=1 // pred_check_branch
      %266 = sbr.rel (0) target = $region41
    $region40: #{net_vanilla_nn_small_forward.1} parent=1 // pred_region
      _
    $region41: #{net_vanilla_nn_small_forward.1} parent=1 // pred_fallthru
      _
    // Predicated region
    $region42: #{net_vanilla_nn_small_forward.1} parent=1 // pred_check
      _
    $region43: #{net_vanilla_nn_small_forward.1} parent=1 // pred_check_branch
      %268 = sbr.rel (0) target = $region45
    $region44: #{net_vanilla_nn_small_forward.1} parent=1 // pred_region
      _
    $region45: #{net_vanilla_nn_small_forward.1} parent=1 // pred_fallthru
      _
    %269 = vsyncpa [#allocation3], 1
    %270 = vsyncpa [#allocation5], 1

</llo_original>
